<compile_context>
chip_gen: v5e
topology: v5e:2x2
jax: 0.10.0
libtpu: 0.0.40
codegen_flags: <defaults>
</compile_context>

<pallas_src>
import functools

import jax
import jax.numpy as jnp
from jax.experimental import pallas as pl
from jax.experimental.pallas import tpu as pltpu


def _round_up(n, m):
    return -(-n // m) * m


def _cdiv(a, b):
    return -(-a // b)


# --------------------------------------------------------------------------
# Kernel factory: fused 3-layer MLP + fused lane-padded (mean|logvar) head,
# one batch tile per grid step.  Weights/biases are full-array, constant
# (Buffered(1)) blocks resident in VMEM across grid steps.
# --------------------------------------------------------------------------
def _make_encoder_kernel(relu_in_bf16):
    def _relu_to_bf16(h_f32):
        if relu_in_bf16:
            # v6e/v7x: bf16 VALUs -> half the VALU-slot occupancy of the max.
            return jnp.maximum(h_f32.astype(jnp.bfloat16), 0.0)
        # v5e and older: no bf16 VPU -> keep the max in f32, then cast.
        return jnp.maximum(h_f32, 0.0).astype(jnp.bfloat16)

    def kernel(x_ref, c_ref, l_ref,
               w1x_ref, w1c_ref, w1l_ref, b1_ref,
               w2_ref, b2_ref,
               w3_ref, b3_ref,
               wh_ref, bh_ref,
               out_ref):
        xb = x_ref[...].astype(jnp.bfloat16)
        cb = c_ref[...].astype(jnp.bfloat16)
        lb = l_ref[...].astype(jnp.bfloat16)

        # Layer 1 (BN folded into W/b; concat replaced by split matmuls).
        h = (jnp.dot(xb, w1x_ref[...], preferred_element_type=jnp.float32)
             + jnp.dot(cb, w1c_ref[...], preferred_element_type=jnp.float32)
             + jnp.dot(lb, w1l_ref[...], preferred_element_type=jnp.float32)
             + b1_ref[...])
        h = _relu_to_bf16(h)

        # Layer 2
        h = jnp.dot(h, w2_ref[...], preferred_element_type=jnp.float32) + b2_ref[...]
        h = _relu_to_bf16(h)

        # Layer 3
        h = jnp.dot(h, w3_ref[...], preferred_element_type=jnp.float32) + b3_ref[...]
        h = _relu_to_bf16(h)

        # Fused, lane-padded output heads: [TB, E2_pad] = [mean | logvar | 0..]
        out_ref[...] = (jnp.dot(h, wh_ref[...], preferred_element_type=jnp.float32)
                        + bh_ref[...]).astype(out_ref.dtype)

    return kernel


# --------------------------------------------------------------------------
# One-time parameter preparation (NOT in the per-call hot path):
#   fold eval-mode BatchNorm into the preceding Linear, split W1 along the
#   (x | c | label) input groups, fuse + lane-pad the two heads to a multiple
#   of 128 output columns, cast matmul weights to bf16, keep biases f32.
# Weight layout here is [fan_in, fan_out]; PyTorch [out, in] weights must be
# transposed before being passed in.
# --------------------------------------------------------------------------
def prepare_params(params, split_sizes, eps=1e-5,
                   compute_dtype=jnp.bfloat16, lane_multiple=128):
    x_cols, c_cols, num_labels = split_sizes

    def fold_bn(w, b, gamma, beta, rm, rv):
        s = gamma / jnp.sqrt(rv + eps)
        t = beta - rm * s
        return w * s[None, :], b * s + t

    w1, b1 = fold_bn(params["w1"], params["b1"], params["g1"], params["be1"],
                     params["rm1"], params["rv1"])
    w2, b2 = fold_bn(params["w2"], params["b2"], params["g2"], params["be2"],
                     params["rm2"], params["rv2"])
    w3, b3 = fold_bn(params["w3"], params["b3"], params["g3"], params["be3"],
                     params["rm3"], params["rv3"])

    assert w1.shape[0] == x_cols + c_cols + num_labels
    w1x = w1[:x_cols]
    w1c = w1[x_cols:x_cols + c_cols]
    w1l = w1[x_cols + c_cols:]

    # Fuse mean / logvar heads and zero-pad to a lane-dense width.
    wh = jnp.concatenate([params["wm"], params["wl"]], axis=1)        # [H3, 2E]
    bh = jnp.concatenate([params["bm"], params["bl"]], axis=0)        # [2E]
    e2 = wh.shape[1]
    e2_pad = _round_up(e2, lane_multiple)
    if e2_pad != e2:
        wh = jnp.pad(wh, ((0, 0), (0, e2_pad - e2)))
        bh = jnp.pad(bh, ((0, e2_pad - e2),))

    cd = compute_dtype
    return {
        "w1x": w1x.astype(cd), "w1c": w1c.astype(cd), "w1l": w1l.astype(cd),
        "b1": b1[None, :].astype(jnp.float32),
        "w2": w2.astype(cd), "b2": b2[None, :].astype(jnp.float32),
        "w3": w3.astype(cd), "b3": b3[None, :].astype(jnp.float32),
        "wh": wh.astype(cd), "bh": bh[None, :].astype(jnp.float32),
    }


# --------------------------------------------------------------------------
# bf16-VPU detection (v6e / v7x yes, v2-v5 no) — picks the ReLU epilogue order
# once per process; the choice is numerically identical either way.
# --------------------------------------------------------------------------
_RELU_BF16_CACHE = None


def _relu_in_bf16():
    global _RELU_BF16_CACHE
    if _RELU_BF16_CACHE is None:
        try:
            kind = jax.devices()[0].device_kind.lower()
        except Exception:
            kind = ""
        _RELU_BF16_CACHE = not any(t in kind for t in ("v2", "v3", "v4", "v5"))
    return _RELU_BF16_CACHE


# --------------------------------------------------------------------------
# Forward wrapper: stream x/c/label batch tiles, keep weights resident,
# lane-dense padded output, split mean/logvar outside.
# --------------------------------------------------------------------------
@functools.partial(jax.jit, static_argnames=("enc_size", "relu_in_bf16"))
def _forward_jit(x, c, label, prepared, enc_size, relu_in_bf16):
    B, x_cols = x.shape
    c_cols = c.shape[1]
    l_cols = label.shape[1]

    w1x, w1c, w1l = prepared["w1x"], prepared["w1c"], prepared["w1l"]
    b1 = prepared["b1"]
    w2, b2 = prepared["w2"], prepared["b2"]
    w3, b3 = prepared["w3"], prepared["b3"]
    wh, bh = prepared["wh"], prepared["bh"]

    H1, H2, H3 = w1x.shape[1], w2.shape[1], w3.shape[1]
    E2_pad = wh.shape[1]
    din = x_cols + c_cols + l_cols

    # ---- batch tiling ------------------------------------------------------
    TB_MAX = 512                               # per-tile VMEM cost is tiny here
    chunks = _cdiv(B, TB_MAX)
    if chunks > 1 and chunks % 2 == 1:
        chunks += 1                            # even grid balances v7x's 2 TCs
    TB = _round_up(_cdiv(B, chunks), 16)       # bf16 sublane packing
    B_pad = TB * chunks
    if B_pad != B:
        pad = ((0, B_pad - B), (0, 0))
        x = jnp.pad(x, pad)
        c = jnp.pad(c, pad)
        label = jnp.pad(label, pad)
    num_tiles = chunks

    # ---- BlockSpecs --------------------------------------------------------
    def stream(width):                         # batch-tiled, double-buffered
        return pl.BlockSpec((TB, width), lambda i: (i, 0))

    def resident(arr):                         # constant block, single buffer
        return pl.BlockSpec(arr.shape, lambda i: (0, 0),
                            pipeline_mode=pl.Buffered(1))

    in_specs = [
        stream(x_cols), stream(c_cols), stream(l_cols),
        resident(w1x), resident(w1c), resident(w1l), resident(b1),
        resident(w2), resident(b2),
        resident(w3), resident(b3),
        resident(wh), resident(bh),
    ]
    out_specs = pl.BlockSpec((TB, E2_pad), lambda i: (i, 0))
    out_shape = jax.ShapeDtypeStruct((B_pad, E2_pad), jnp.float32)

    # ---- VMEM budget / scheduler hints --------------------------------------
    weight_bytes = sum(int(v.size) * v.dtype.itemsize for v in prepared.values())
    in_tile_bytes = TB * din * x.dtype.itemsize            # one x|c|label buffer set
    out_tile_bytes = TB * E2_pad * 4
    act_bytes = 2 * TB * max(H1, H2, H3, E2_pad) * 4       # in-kernel intermediates
    vmem_limit = (weight_bytes + 2 * in_tile_bytes + 2 * out_tile_bytes
                  + act_bytes + (8 << 20))                  # headroom
    vmem_limit = int(min(max(vmem_limit, 16 << 20), 64 << 20))

    flops = 2 * B_pad * (din * H1 + H1 * H2 + H2 * H3 + H3 * E2_pad)
    bytes_accessed = (B_pad * din * x.dtype.itemsize
                      + B_pad * E2_pad * 4
                      + weight_bytes)

    out = pl.pallas_call(
        _make_encoder_kernel(relu_in_bf16),
        out_shape=out_shape,
        grid=(num_tiles,),
        in_specs=in_specs,
        out_specs=out_specs,
        compiler_params=pltpu.CompilerParams(
            dimension_semantics=("parallel",),   # v7x: shard batch over 2 TCs
            vmem_limit_bytes=vmem_limit),
        cost_estimate=pl.CostEstimate(
            flops=int(flops), transcendentals=0,
            bytes_accessed=int(bytes_accessed)),
    )(x, c, label, w1x, w1c, w1l, b1, w2, b2, w3, b3, wh, bh)

    z_mean = out[:B, :enc_size]
    z_logvar = out[:B, enc_size:2 * enc_size]
    return z_mean, z_logvar


def gaussian_nn_encoder_forward(x, c, label, prepared, enc_size):
    return _forward_jit(x, c, label, prepared, enc_size, _relu_in_bf16())


# --------------------------------------------------------------------------
# Deterministic PyTorch-style init (uniform +-1/sqrt(fan_in)), weights stored
# as [fan_in, fan_out].
# --------------------------------------------------------------------------
def init_params(key, data_size, num_labels, h1, h2, h3, encoded_size):
    din = data_size + num_labels
    ks = jax.random.split(key, 10)

    def linear(kw, kb, fan_in, fan_out):
        bound = 1.0 / jnp.sqrt(fan_in)
        w = jax.random.uniform(kw, (fan_in, fan_out), jnp.float32, -bound, bound)
        b = jax.random.uniform(kb, (fan_out,), jnp.float32, -bound, bound)
        return w, b

    p = {}
    p["w1"], p["b1"] = linear(ks[0], ks[1], din, h1)
    p["w2"], p["b2"] = linear(ks[2], ks[3], h1, h2)
    p["w3"], p["b3"] = linear(ks[4], ks[5], h2, h3)
    p["wm"], p["bm"] = linear(ks[6], ks[7], h3, encoded_size)
    p["wl"], p["bl"] = linear(ks[8], ks[9], h3, encoded_size)
    # BatchNorm1d affine params / running stats (PyTorch defaults)
    for i, h in zip((1, 2, 3), (h1, h2, h3)):
        p[f"g{i}"] = jnp.ones((h,), jnp.float32)
        p[f"be{i}"] = jnp.zeros((h,), jnp.float32)
        p[f"rm{i}"] = jnp.zeros((h,), jnp.float32)
        p[f"rv{i}"] = jnp.ones((h,), jnp.float32)
    return p


# Pure-JAX eval-mode reference (f32) for correctness checking.
def _reference_forward(x, c, label, params, eps=1e-5):
    h = jnp.concatenate([x, c, label], axis=1)

    def layer(h, w, b, g, be, rm, rv):
        y = h @ w + b
        y = (y - rm) / jnp.sqrt(rv + eps) * g + be
        return jnp.maximum(y, 0.0)

    h = layer(h, params["w1"], params["b1"], params["g1"], params["be1"],
              params["rm1"], params["rv1"])
    h = layer(h, params["w2"], params["b2"], params["g2"], params["be2"],
              params["rm2"], params["rv2"])
    h = layer(h, params["w3"], params["b3"], params["g3"], params["be3"],
              params["rm3"], params["rv3"])
    return h @ params["wm"] + params["bm"], h @ params["wl"] + params["bl"]


if __name__ == "__main__":
    # Small synthetic shapes consistent with the module's forward:
    # encoder input dim = (x cols + c cols) + num_labels = (8 + 4) + 4 = 16.
    B = 8
    x_cols = 8
    c_cols = 4
    num_labels = 4
    H1, H2, H3 = 32, 32, 32
    ENC = 8

    key = jax.random.PRNGKey(0)
    kx, kc, kl, kp = jax.random.split(key, 4)
    x = jax.random.normal(kx, (B, x_cols), jnp.float32)
    c = jax.random.normal(kc, (B, c_cols), jnp.float32)
    label = (jax.random.uniform(kl, (B, num_labels)) > 0.5).astype(jnp.float32)

    # data_size (as in the PyTorch module) covers the x+c continuous block.
    params = init_params(kp, x_cols + c_cols, num_labels, H1, H2, H3, ENC)
    # one-time: fold BN, split W1 by input group, fuse+pad heads, cast bf16
    prepared = prepare_params(params, (x_cols, c_cols, num_labels))

    z_mean, z_logvar = gaussian_nn_encoder_forward(x, c, label, prepared, ENC)
    jax.block_until_ready((z_mean, z_logvar))

    assert z_mean.shape == (B, ENC) and z_logvar.shape == (B, ENC)
    assert z_mean.dtype == jnp.float32 and z_logvar.dtype == jnp.float32
    assert bool(jnp.all(jnp.isfinite(z_mean))) and bool(jnp.all(jnp.isfinite(z_logvar)))

    # Compare against the f32 reference (bf16 weights/activations -> loose tol).
    ref_mean, ref_logvar = _reference_forward(x, c, label, params)
    assert bool(jnp.allclose(z_mean, ref_mean, atol=5e-2, rtol=5e-2))
    assert bool(jnp.allclose(z_logvar, ref_logvar, atol=5e-2, rtol=5e-2))

    print("KERNEL_OK")
</pallas_src>

<mosaic_0001>
module attributes {stable_mosaic.version = 11 : i64} {
  func.func @kernel(%arg0: i32, %arg1: memref<16x8xf32, #tpu.memory_space<vmem>>, %arg2: memref<16x4xf32, #tpu.memory_space<vmem>>, %arg3: memref<16x4xf32, #tpu.memory_space<vmem>>, %arg4: memref<8x32xbf16, #tpu.memory_space<vmem>>, %arg5: memref<4x32xbf16, #tpu.memory_space<vmem>>, %arg6: memref<4x32xbf16, #tpu.memory_space<vmem>>, %arg7: memref<1x32xf32, #tpu.memory_space<vmem>>, %arg8: memref<32x32xbf16, #tpu.memory_space<vmem>>, %arg9: memref<1x32xf32, #tpu.memory_space<vmem>>, %arg10: memref<32x32xbf16, #tpu.memory_space<vmem>>, %arg11: memref<1x32xf32, #tpu.memory_space<vmem>>, %arg12: memref<32x128xbf16, #tpu.memory_space<vmem>>, %arg13: memref<1x128xf32, #tpu.memory_space<vmem>>, %arg14: memref<16x128xf32, #tpu.memory_space<vmem>>) attributes {dimension_semantics = [#tpu.dimension_semantics<parallel>], iteration_bounds = array<i64: 1>, scalar_prefetch = 0 : i64, scratch_operands = 0 : i64, tpu.core_type = #tpu.core_type<tc>, window_params = [{transform_indices = @transform_0, window_bounds = array<i64: 16, 8>}, {transform_indices = @transform_1, window_bounds = array<i64: 16, 4>}, {transform_indices = @transform_2, window_bounds = array<i64: 16, 4>}, {pipeline_mode = #tpu.pipeline_mode<synchronous>, transform_indices = @transform_3, window_bounds = array<i64: 8, 32>}, {pipeline_mode = #tpu.pipeline_mode<synchronous>, transform_indices = @transform_4, window_bounds = array<i64: 4, 32>}, {pipeline_mode = #tpu.pipeline_mode<synchronous>, transform_indices = @transform_5, window_bounds = array<i64: 4, 32>}, {pipeline_mode = #tpu.pipeline_mode<synchronous>, transform_indices = @transform_6, window_bounds = array<i64: 1, 32>}, {pipeline_mode = #tpu.pipeline_mode<synchronous>, transform_indices = @transform_7, window_bounds = array<i64: 32, 32>}, {pipeline_mode = #tpu.pipeline_mode<synchronous>, transform_indices = @transform_8, window_bounds = array<i64: 1, 32>}, {pipeline_mode = #tpu.pipeline_mode<synchronous>, transform_indices = @transform_9, window_bounds = array<i64: 32, 32>}, {pipeline_mode = #tpu.pipeline_mode<synchronous>, transform_indices = @transform_10, window_bounds = array<i64: 1, 32>}, {pipeline_mode = #tpu.pipeline_mode<synchronous>, transform_indices = @transform_11, window_bounds = array<i64: 32, 128>}, {pipeline_mode = #tpu.pipeline_mode<synchronous>, transform_indices = @transform_12, window_bounds = array<i64: 1, 128>}, {transform_indices = @transform_13, window_bounds = array<i64: 16, 128>}]} {
    %c0 = arith.constant 0 : index
    %c0_0 = arith.constant 0 : index
    %0 = vector.load %arg1[%c0, %c0_0] : memref<16x8xf32, #tpu.memory_space<vmem>>, vector<16x8xf32>
    %1 = arith.truncf %0 : vector<16x8xf32> to vector<16x8xbf16>
    %c0_1 = arith.constant 0 : index
    %c0_2 = arith.constant 0 : index
    %2 = vector.load %arg2[%c0_1, %c0_2] : memref<16x4xf32, #tpu.memory_space<vmem>>, vector<16x4xf32>
    %3 = arith.truncf %2 : vector<16x4xf32> to vector<16x4xbf16>
    %c0_3 = arith.constant 0 : index
    %c0_4 = arith.constant 0 : index
    %4 = vector.load %arg3[%c0_3, %c0_4] : memref<16x4xf32, #tpu.memory_space<vmem>>, vector<16x4xf32>
    %5 = arith.truncf %4 : vector<16x4xf32> to vector<16x4xbf16>
    %c0_5 = arith.constant 0 : index
    %c0_6 = arith.constant 0 : index
    %6 = vector.load %arg4[%c0_5, %c0_6] : memref<8x32xbf16, #tpu.memory_space<vmem>>, vector<8x32xbf16>
    %cst = arith.constant dense<0.000000e+00> : vector<16x32xf32>
    %7 = tpu.matmul %1, %6, %cst {dimension_numbers = #tpu.dot_dimension_numbers<[1], [0], [0], [1], [0, 0, 1, 1], [], []>} : vector<16x8xbf16>, vector<8x32xbf16>, vector<16x32xf32> -> vector<16x32xf32>
    %c0_7 = arith.constant 0 : index
    %c0_8 = arith.constant 0 : index
    %8 = vector.load %arg5[%c0_7, %c0_8] : memref<4x32xbf16, #tpu.memory_space<vmem>>, vector<4x32xbf16>
    %cst_9 = arith.constant dense<0.000000e+00> : vector<16x32xf32>
    %9 = tpu.matmul %3, %8, %cst_9 {dimension_numbers = #tpu.dot_dimension_numbers<[1], [0], [0], [1], [0, 0, 1, 1], [], []>} : vector<16x4xbf16>, vector<4x32xbf16>, vector<16x32xf32> -> vector<16x32xf32>
    %10 = arith.addf %7, %9 : vector<16x32xf32>
    %c0_10 = arith.constant 0 : index
    %c0_11 = arith.constant 0 : index
    %11 = vector.load %arg6[%c0_10, %c0_11] : memref<4x32xbf16, #tpu.memory_space<vmem>>, vector<4x32xbf16>
    %cst_12 = arith.constant dense<0.000000e+00> : vector<16x32xf32>
    %12 = tpu.matmul %5, %11, %cst_12 {dimension_numbers = #tpu.dot_dimension_numbers<[1], [0], [0], [1], [0, 0, 1, 1], [], []>} : vector<16x4xbf16>, vector<4x32xbf16>, vector<16x32xf32> -> vector<16x32xf32>
    %13 = arith.addf %10, %12 : vector<16x32xf32>
    %c0_13 = arith.constant 0 : index
    %c0_14 = arith.constant 0 : index
    %14 = vector.load %arg7[%c0_13, %c0_14] : memref<1x32xf32, #tpu.memory_space<vmem>>, vector<1x32xf32>
    %15 = vector.broadcast %14 : vector<1x32xf32> to vector<16x32xf32>
    %16 = arith.addf %13, %15 : vector<16x32xf32>
    %17 = arith.truncf %16 : vector<16x32xf32> to vector<16x32xbf16>
    %cst_15 = arith.constant 0.000000e+00 : bf16
    %18 = vector.broadcast %cst_15 : bf16 to vector<16x32xbf16>
    %19 = arith.maximumf %17, %18 : vector<16x32xbf16>
    %c0_16 = arith.constant 0 : index
    %c0_17 = arith.constant 0 : index
    %20 = vector.load %arg8[%c0_16, %c0_17] : memref<32x32xbf16, #tpu.memory_space<vmem>>, vector<32x32xbf16>
    %cst_18 = arith.constant dense<0.000000e+00> : vector<16x32xf32>
    %21 = tpu.matmul %19, %20, %cst_18 {dimension_numbers = #tpu.dot_dimension_numbers<[1], [0], [0], [1], [0, 0, 1, 1], [], []>} : vector<16x32xbf16>, vector<32x32xbf16>, vector<16x32xf32> -> vector<16x32xf32>
    %c0_19 = arith.constant 0 : index
    %c0_20 = arith.constant 0 : index
    %22 = vector.load %arg9[%c0_19, %c0_20] : memref<1x32xf32, #tpu.memory_space<vmem>>, vector<1x32xf32>
    %23 = vector.broadcast %22 : vector<1x32xf32> to vector<16x32xf32>
    %24 = arith.addf %21, %23 : vector<16x32xf32>
    %25 = arith.truncf %24 : vector<16x32xf32> to vector<16x32xbf16>
    %cst_21 = arith.constant 0.000000e+00 : bf16
    %26 = vector.broadcast %cst_21 : bf16 to vector<16x32xbf16>
    %27 = arith.maximumf %25, %26 : vector<16x32xbf16>
    %c0_22 = arith.constant 0 : index
    %c0_23 = arith.constant 0 : index
    %28 = vector.load %arg10[%c0_22, %c0_23] : memref<32x32xbf16, #tpu.memory_space<vmem>>, vector<32x32xbf16>
    %cst_24 = arith.constant dense<0.000000e+00> : vector<16x32xf32>
    %29 = tpu.matmul %27, %28, %cst_24 {dimension_numbers = #tpu.dot_dimension_numbers<[1], [0], [0], [1], [0, 0, 1, 1], [], []>} : vector<16x32xbf16>, vector<32x32xbf16>, vector<16x32xf32> -> vector<16x32xf32>
    %c0_25 = arith.constant 0 : index
    %c0_26 = arith.constant 0 : index
    %30 = vector.load %arg11[%c0_25, %c0_26] : memref<1x32xf32, #tpu.memory_space<vmem>>, vector<1x32xf32>
    %31 = vector.broadcast %30 : vector<1x32xf32> to vector<16x32xf32>
    %32 = arith.addf %29, %31 : vector<16x32xf32>
    %33 = arith.truncf %32 : vector<16x32xf32> to vector<16x32xbf16>
    %cst_27 = arith.constant 0.000000e+00 : bf16
    %34 = vector.broadcast %cst_27 : bf16 to vector<16x32xbf16>
    %35 = arith.maximumf %33, %34 : vector<16x32xbf16>
    %c0_28 = arith.constant 0 : index
    %c0_29 = arith.constant 0 : index
    %36 = vector.load %arg12[%c0_28, %c0_29] : memref<32x128xbf16, #tpu.memory_space<vmem>>, vector<32x128xbf16>
    %cst_30 = arith.constant dense<0.000000e+00> : vector<16x128xf32>
    %37 = tpu.matmul %35, %36, %cst_30 {dimension_numbers = #tpu.dot_dimension_numbers<[1], [0], [0], [1], [0, 0, 1, 1], [], []>} : vector<16x32xbf16>, vector<32x128xbf16>, vector<16x128xf32> -> vector<16x128xf32>
    %c0_31 = arith.constant 0 : index
    %c0_32 = arith.constant 0 : index
    %38 = vector.load %arg13[%c0_31, %c0_32] : memref<1x128xf32, #tpu.memory_space<vmem>>, vector<1x128xf32>
    %39 = vector.broadcast %38 : vector<1x128xf32> to vector<16x128xf32>
    %40 = arith.addf %37, %39 : vector<16x128xf32>
    %c0_33 = arith.constant 0 : index
    %c0_34 = arith.constant 0 : index
    %41 = vector.load %arg14[%c0_33, %c0_34] : memref<16x128xf32, #tpu.memory_space<vmem>>, vector<16x128xf32>
    tpu.vector_store %arg14[%c0_33, %c0_34], %40 {strides = array<i32>} : memref<16x128xf32, #tpu.memory_space<vmem>>, vector<16x128xf32>,
    return
  }
  func.func @transform_0(%arg0: i32) -> (i32, i32) {
    %c0_i32 = arith.constant 0 : i32
    %c0_i32_0 = arith.constant 0 : i32
    return %arg0, %c0_i32 : i32, i32
  }
  func.func @transform_1(%arg0: i32) -> (i32, i32) {
    %c0_i32 = arith.constant 0 : i32
    %c0_i32_0 = arith.constant 0 : i32
    return %arg0, %c0_i32 : i32, i32
  }
  func.func @transform_2(%arg0: i32) -> (i32, i32) {
    %c0_i32 = arith.constant 0 : i32
    %c0_i32_0 = arith.constant 0 : i32
    return %arg0, %c0_i32 : i32, i32
  }
  func.func @transform_3(%arg0: i32) -> (i32, i32) {
    %c0_i32 = arith.constant 0 : i32
    %c0_i32_0 = arith.constant 0 : i32
    %c0_i32_1 = arith.constant 0 : i32
    return %c0_i32, %c0_i32_0 : i32, i32
  }
  func.func @transform_4(%arg0: i32) -> (i32, i32) {
    %c0_i32 = arith.constant 0 : i32
    %c0_i32_0 = arith.constant 0 : i32
    %c0_i32_1 = arith.constant 0 : i32
    return %c0_i32, %c0_i32_0 : i32, i32
  }
  func.func @transform_5(%arg0: i32) -> (i32, i32) {
    %c0_i32 = arith.constant 0 : i32
    %c0_i32_0 = arith.constant 0 : i32
    %c0_i32_1 = arith.constant 0 : i32
    return %c0_i32, %c0_i32_0 : i32, i32
  }
  func.func @transform_6(%arg0: i32) -> (i32, i32) {
    %c0_i32 = arith.constant 0 : i32
    %c0_i32_0 = arith.constant 0 : i32
    %c0_i32_1 = arith.constant 0 : i32
    return %c0_i32, %c0_i32_0 : i32, i32
  }
  func.func @transform_7(%arg0: i32) -> (i32, i32) {
    %c0_i32 = arith.constant 0 : i32
    %c0_i32_0 = arith.constant 0 : i32
    %c0_i32_1 = arith.constant 0 : i32
    return %c0_i32, %c0_i32_0 : i32, i32
  }
  func.func @transform_8(%arg0: i32) -> (i32, i32) {
    %c0_i32 = arith.constant 0 : i32
    %c0_i32_0 = arith.constant 0 : i32
    %c0_i32_1 = arith.constant 0 : i32
    return %c0_i32, %c0_i32_0 : i32, i32
  }
  func.func @transform_9(%arg0: i32) -> (i32, i32) {
    %c0_i32 = arith.constant 0 : i32
    %c0_i32_0 = arith.constant 0 : i32
    %c0_i32_1 = arith.constant 0 : i32
    return %c0_i32, %c0_i32_0 : i32, i32
  }
  func.func @transform_10(%arg0: i32) -> (i32, i32) {
    %c0_i32 = arith.constant 0 : i32
    %c0_i32_0 = arith.constant 0 : i32
    %c0_i32_1 = arith.constant 0 : i32
    return %c0_i32, %c0_i32_0 : i32, i32
  }
  func.func @transform_11(%arg0: i32) -> (i32, i32) {
    %c0_i32 = arith.constant 0 : i32
    %c0_i32_0 = arith.constant 0 : i32
    %c0_i32_1 = arith.constant 0 : i32
    return %c0_i32, %c0_i32_0 : i32, i32
  }
  func.func @transform_12(%arg0: i32) -> (i32, i32) {
    %c0_i32 = arith.constant 0 : i32
    %c0_i32_0 = arith.constant 0 : i32
    %c0_i32_1 = arith.constant 0 : i32
    return %c0_i32, %c0_i32_0 : i32, i32
  }
  func.func @transform_13(%arg0: i32) -> (i32, i32) {
    %c0_i32 = arith.constant 0 : i32
    %c0_i32_0 = arith.constant 0 : i32
    return %arg0, %c0_i32 : i32, i32
  }
}

</mosaic_0001>

<llo_original>
// kernel: _forward_jit.1
$region0: #{_forward_jit.1}
  #allocation0 [shape = 'u32[]', space=smem, size = 0x4, offset = 0x4, fixed_abs, tag = 'smem constant byte address 0x4 - core index']
  #allocation1 [shape = 'u32[72,128]{1,0:T(1,128)}', space=vmem, size = 0x9000, scoped, tag = 'internal scratch']
  %s0 = inlined_call_operand.vmem [shape: f32[16,8], index: 0, kind: input, shape index: {}]
  %s1 = inlined_call_operand.vmem [shape: f32[16,4], index: 1, kind: input, shape index: {}]
  %s2 = inlined_call_operand.vmem [shape: f32[16,4], index: 2, kind: input, shape index: {}]
  %s3 = inlined_call_operand.vmem [shape: bf16[8,32], index: 3, kind: input, shape index: {}]
  %s4 = inlined_call_operand.vmem [shape: bf16[4,32], index: 4, kind: input, shape index: {}]
  %s5 = inlined_call_operand.vmem [shape: bf16[4,32], index: 5, kind: input, shape index: {}]
  %s6 = inlined_call_operand.vmem [shape: f32[1,32], index: 6, kind: input, shape index: {}]
  %s7 = inlined_call_operand.vmem [shape: bf16[32,32], index: 7, kind: input, shape index: {}]
  %s8 = inlined_call_operand.vmem [shape: f32[1,32], index: 8, kind: input, shape index: {}]
  %s9 = inlined_call_operand.vmem [shape: bf16[32,32], index: 9, kind: input, shape index: {}]
  %s10 = inlined_call_operand.vmem [shape: f32[1,32], index: 10, kind: input, shape index: {}]
  %s11 = inlined_call_operand.vmem [shape: bf16[32,128], index: 11, kind: input, shape index: {}]
  %s12 = inlined_call_operand.vmem [shape: f32[1,128], index: 12, kind: input, shape index: {}]
  %s13 = inlined_call_operand.vmem [shape: f32[16,128], index: 13, kind: output, shape index: {}]
  %s14 = sld [smem:[#allocation0]]
  $region62: #{_forward_jit.1} parent=0
    _
  %s16 = ssub.s32 1, %s14
  %s17 = scalar_select 0, %s16, %s14
  // Predicated region
  $region2: #{_forward_jit.1} parent=0 // pred_check
    _
  $region3: #{_forward_jit.1} parent=0 // pred_check_branch
    %19 = sbr.rel (0) target = $region5
  $region4: #{_forward_jit.1} parent=0 // pred_region
    _
  $region5: #{_forward_jit.1} parent=0 // pred_fallthru
    _
  // Predicated region
  $region6: #{_forward_jit.1} parent=0 // pred_check
    _
  $region7: #{_forward_jit.1} parent=0 // pred_check_branch
    %21 = sbr.rel (0) target = $region9
  $region8: #{_forward_jit.1} parent=0 // pred_region
    _
  $region9: #{_forward_jit.1} parent=0 // pred_fallthru
    _
  // Predicated region
  $region10: #{_forward_jit.1} parent=0 // pred_check
    _
  $region11: #{_forward_jit.1} parent=0 // pred_check_branch
    %23 = sbr.rel (0) target = $region13
  $region12: #{_forward_jit.1} parent=0 // pred_region
    _
  $region13: #{_forward_jit.1} parent=0 // pred_fallthru
    _
  // Predicated region
  $region14: #{_forward_jit.1} parent=0 // pred_check
    _
  $region15: #{_forward_jit.1} parent=0 // pred_check_branch
    %25 = sbr.rel (0) target = $region17
  $region16: #{_forward_jit.1} parent=0 // pred_region
    _
  $region17: #{_forward_jit.1} parent=0 // pred_fallthru
    _
  // Predicated region
  $region18: #{_forward_jit.1} parent=0 // pred_check
    _
  $region19: #{_forward_jit.1} parent=0 // pred_check_branch
    %27 = sbr.rel (0) target = $region21
  $region20: #{_forward_jit.1} parent=0 // pred_region
    _
  $region21: #{_forward_jit.1} parent=0 // pred_fallthru
    _
  // Predicated region
  $region22: #{_forward_jit.1} parent=0 // pred_check
    _
  $region23: #{_forward_jit.1} parent=0 // pred_check_branch
    %29 = sbr.rel (0) target = $region25
  $region24: #{_forward_jit.1} parent=0 // pred_region
    _
  $region25: #{_forward_jit.1} parent=0 // pred_fallthru
    _
  // Predicated region
  $region26: #{_forward_jit.1} parent=0 // pred_check
    _
  $region27: #{_forward_jit.1} parent=0 // pred_check_branch
    %31 = sbr.rel (0) target = $region29
  $region28: #{_forward_jit.1} parent=0 // pred_region
    _
  $region29: #{_forward_jit.1} parent=0 // pred_fallthru
    _
  // Predicated region
  $region30: #{_forward_jit.1} parent=0 // pred_check
    _
  $region31: #{_forward_jit.1} parent=0 // pred_check_branch
    %33 = sbr.rel (0) target = $region33
  $region32: #{_forward_jit.1} parent=0 // pred_region
    _
  $region33: #{_forward_jit.1} parent=0 // pred_fallthru
    _
  // Predicated region
  $region34: #{_forward_jit.1} parent=0 // pred_check
    _
  $region35: #{_forward_jit.1} parent=0 // pred_check_branch
    %35 = sbr.rel (0) target = $region37
  $region36: #{_forward_jit.1} parent=0 // pred_region
    _
  $region37: #{_forward_jit.1} parent=0 // pred_fallthru
    _
  // Predicated region
  $region38: #{_forward_jit.1} parent=0 // pred_check
    _
  $region39: #{_forward_jit.1} parent=0 // pred_check_branch
    %37 = sbr.rel (0) target = $region41
  $region40: #{_forward_jit.1} parent=0 // pred_region
    _
  $region41: #{_forward_jit.1} parent=0 // pred_fallthru
    _
  // Predicated region
  $region42: #{_forward_jit.1} parent=0 // pred_check
    _
  $region43: #{_forward_jit.1} parent=0 // pred_check_branch
    %39 = sbr.rel (0) target = $region45
  $region44: #{_forward_jit.1} parent=0 // pred_region
    _
  $region45: #{_forward_jit.1} parent=0 // pred_fallthru
    _
  // Predicated region
  $region46: #{_forward_jit.1} parent=0 // pred_check
    _
  $region47: #{_forward_jit.1} parent=0 // pred_check_branch
    %41 = sbr.rel (0) target = $region49
  $region48: #{_forward_jit.1} parent=0 // pred_region
    _
  $region49: #{_forward_jit.1} parent=0 // pred_fallthru
    _
  // Predicated region
  $region50: #{_forward_jit.1} parent=0 // pred_check
    _
  $region51: #{_forward_jit.1} parent=0 // pred_check_branch
    %43 = sbr.rel (0) target = $region53
  $region52: #{_forward_jit.1} parent=0 // pred_region
    _
  $region53: #{_forward_jit.1} parent=0 // pred_fallthru
    _
  %v45 = vld [vmem:[%s0] sm:$0xff]
  %v46 = vld [vmem:[%s0 + $0x8] sm:$0xff]
  %v47 = vpack.c.bf16 %v46, %v45
  %v48 = vld [vmem:[%s1] sm:$0xff]
  %v49 = vld [vmem:[%s1 + $0x8] sm:$0xff]
  %v50 = vpack.c.bf16 %v49, %v48
  %v51 = vld [vmem:[%s2] sm:$0xff]
  %v52 = vld [vmem:[%s2 + $0x8] sm:$0xff]
  %v53 = vpack.c.bf16 %v52, %v51
  %v54 = vld [vmem:[%s3] sm:$0xf]
  %v55 = vld [vmem:[%s4] sm:$0x3]
  %vm56 = vcmask 31744
  %v58 = vsel %vm56, %v50, 0
  %vm60 = vcmask 1041408
  %v62 = vsel %vm60, %v55, 0
  %64 = vmatpush.bf16.msra.mxu0 0
  %65 = vmatpush.bf16.msra.mxu0 0
  %66 = vmatpush.bf16.msra.mxu0 0
  %67 = vmatpush.bf16.msra.mxu0 0
  %68 = vmatpush.bf16.msra.mxu0 0
  %69 = vmatpush.bf16.msra.mxu0 0
  %70 = vmatpush.bf16.msra.mxu0 0
  %71 = vmatpush.bf16.msra.mxu0 %v62
  %72 = vmatmul.bf16.gmra.mxu0 %v58
  %v73 = vpop.f32.mrf.mxu0
  %v74 = vadd.f32 0.0, %v73
  %v75 = vpop.f32.mrf.mxu0
  %v76 = vadd.f32 0.0, %v75
  %77 = vdwg.mxu0
  %vm78 = vcmask 64512
  %v80 = vsel %vm78, %v47, 0
  %vm82 = vcmask 1043456
  %v84 = vsel %vm82, %v54, 0
  %86 = vmatpush.bf16.msra.mxu0 0
  %87 = vmatpush.bf16.msra.mxu0 0
  %88 = vmatpush.bf16.msra.mxu0 0
  %89 = vmatpush.bf16.msra.mxu0 0
  %90 = vmatpush.bf16.msra.mxu0 0
  %91 = vmatpush.bf16.msra.mxu0 0
  %92 = vmatpush.bf16.msra.mxu0 0
  %93 = vmatpush.bf16.msra.mxu0 %v84
  %94 = vmatmul.bf16.gmra.mxu0 %v80
  %v95 = vpop.f32.mrf.mxu0
  %v96 = vadd.f32 %v74, %v95
  %v97 = vpop.f32.mrf.mxu0
  %v98 = vadd.f32 %v76, %v97
  %99 = vdwg.mxu0
  %v100 = vld [vmem:[%s5] sm:$0x3]
  %v102 = vsel %vm56, %v53, 0
  %v105 = vsel %vm60, %v100, 0
  %107 = vmatpush.bf16.msra.mxu0 0
  %108 = vmatpush.bf16.msra.mxu0 0
  %109 = vmatpush.bf16.msra.mxu0 0
  %110 = vmatpush.bf16.msra.mxu0 0
  %111 = vmatpush.bf16.msra.mxu0 0
  %112 = vmatpush.bf16.msra.mxu0 0
  %113 = vmatpush.bf16.msra.mxu0 0
  %114 = vmatpush.bf16.msra.mxu0 %v105
  %115 = vmatmul.bf16.gmra.mxu0 %v102
  %v116 = vpop.f32.mrf.mxu0
  %v117 = vadd.f32 0.0, %v116
  %v118 = vpop.f32.mrf.mxu0
  %v119 = vadd.f32 0.0, %v118
  %120 = vdwg.mxu0
  %v121 = vadd.f32 %v96, %v117
  %v122 = vadd.f32 %v98, %v119
  %v123 = vld [vmem:[%s6] sm:$0x1]
  %v125 = vperm.slane %v123, 0
  %v127 = vadd.f32 %v121, %v125
  %v128 = vadd.f32 %v122, %v125
  %v129 = vpack.c.bf16 %v127, %v127
  %v130 = vpack.c.bf16 %v128, %v128
  %v131 = vunpack.c.l.bf16 %v129
  %v132 = vunpack.c.l.bf16 %v130
  %v133 = vmax.f32 %v131, 0.0
  %v134 = vmax.f32 %v132, 0.0
  %v135 = vpack.c.bf16 %v134, %v133
  %v136 = vld [vmem:[%s7] sm:$0xf]
  %v137 = vld [vmem:[%s7 + $0x4] sm:$0xf]
  %v138 = vld [vmem:[%s7 + $0x8] sm:$0xf]
  %v139 = vld [vmem:[%s7 + $0xc] sm:$0xf]
  %v140 = vld [vmem:[%s8] sm:$0x1]
  %v142 = vperm.slane %v140, 0
  %v148 = vunpack.c.l.b16 %v136
  %v149 = vunpack.c.l.b16 %v137
  %v150 = vunpack.c.l.b16 %v138
  %v151 = vunpack.c.l.b16 %v139
  %v152 = vpack.c.b16 %v149, %v148
  %v153 = vpack.c.b16 %v151, %v150
  %vm156 = vcmask 261120
  %v158 = vsel %vm156, %v135, 0
  %160 = vmatpush.bf16.msra.mxu0 0
  %161 = vmatpush.bf16.msra.mxu0 0
  %162 = vmatpush.bf16.msra.mxu0 0
  %163 = vmatpush.bf16.msra.mxu0 0
  %164 = vmatpush.bf16.msra.mxu0 0
  %165 = vmatpush.bf16.msra.mxu0 0
  %166 = vmatpush.bf16.msra.mxu0 %v153
  %167 = vmatpush.bf16.msra.mxu0 %v152
  %168 = vmatmul.bf16.gmra.mxu0 %v158
  %v169 = vpop.f32.mrf.mxu0
  %v170 = vadd.f32 %v142, %v169
  %v171 = vpop.f32.mrf.mxu0
  %v172 = vadd.f32 %v142, %v171
  %173 = vdwg.mxu0
  %v174 = vpack.c.bf16 %v170, %v170
  %v175 = vpack.c.bf16 %v172, %v172
  %v176 = vunpack.c.l.bf16 %v174
  %v177 = vunpack.c.l.bf16 %v175
  %v178 = vmax.f32 %v176, 0.0
  %v179 = vmax.f32 %v177, 0.0
  %v180 = vpack.c.bf16 %v179, %v178
  %v181 = vld [vmem:[%s9] sm:$0xf]
  %v182 = vld [vmem:[%s9 + $0x4] sm:$0xf]
  %v183 = vld [vmem:[%s9 + $0x8] sm:$0xf]
  %v184 = vld [vmem:[%s9 + $0xc] sm:$0xf]
  %v185 = vld [vmem:[%s10] sm:$0x1]
  %v187 = vperm.slane %v185, 0
  %v193 = vunpack.c.l.b16 %v181
  %v194 = vunpack.c.l.b16 %v182
  %v195 = vunpack.c.l.b16 %v183
  %v196 = vunpack.c.l.b16 %v184
  %v197 = vpack.c.b16 %v194, %v193
  %v198 = vpack.c.b16 %v196, %v195
  %v202 = vsel %vm156, %v180, 0
  %204 = vmatpush.bf16.msra.mxu0 0
  %205 = vmatpush.bf16.msra.mxu0 0
  %206 = vmatpush.bf16.msra.mxu0 0
  %207 = vmatpush.bf16.msra.mxu0 0
  %208 = vmatpush.bf16.msra.mxu0 0
  %209 = vmatpush.bf16.msra.mxu0 0
  %210 = vmatpush.bf16.msra.mxu0 %v198
  %211 = vmatpush.bf16.msra.mxu0 %v197
  %212 = vmatmul.bf16.gmra.mxu0 %v202
  %v213 = vpop.f32.mrf.mxu0
  %v214 = vadd.f32 %v187, %v213
  %v215 = vpop.f32.mrf.mxu0
  %v216 = vadd.f32 %v187, %v215
  %217 = vdwg.mxu0
  %v218 = vpack.c.bf16 %v214, %v214
  %v219 = vpack.c.bf16 %v216, %v216
  %v220 = vunpack.c.l.bf16 %v218
  %v221 = vunpack.c.l.bf16 %v219
  %v222 = vmax.f32 %v220, 0.0
  %v223 = vmax.f32 %v221, 0.0
  %v224 = vpack.c.bf16 %v223, %v222
  %v225 = vld [vmem:[%s11] sm:$0xf]
  %v226 = vld [vmem:[%s11 + $0x4] sm:$0xf]
  %v227 = vld [vmem:[%s11 + $0x8] sm:$0xf]
  %v228 = vld [vmem:[%s11 + $0xc] sm:$0xf]
  %v229 = vld [vmem:[%s12] sm:$0x1]
  %v231 = vperm.slane %v229, 0
  %v237 = vunpack.c.l.b16 %v225
  %v238 = vunpack.c.l.b16 %v226
  %v239 = vunpack.c.l.b16 %v227
  %v240 = vunpack.c.l.b16 %v228
  %v241 = vpack.c.b16 %v238, %v237
  %v242 = vpack.c.b16 %v240, %v239
  %v246 = vsel %vm156, %v224, 0
  %248 = vmatpush.bf16.msra.mxu0 0
  %249 = vmatpush.bf16.msra.mxu0 0
  %250 = vmatpush.bf16.msra.mxu0 0
  %251 = vmatpush.bf16.msra.mxu0 0
  %252 = vmatpush.bf16.msra.mxu0 0
  %253 = vmatpush.bf16.msra.mxu0 0
  %254 = vmatpush.bf16.msra.mxu0 %v242
  %255 = vmatpush.bf16.msra.mxu0 %v241
  %256 = vmatmul.bf16.gmra.mxu0 %v246
  %v257 = vpop.f32.mrf.mxu0
  %v258 = vadd.f32 %v231, %v257
  %v259 = vpop.f32.mrf.mxu0
  %v260 = vadd.f32 %v231, %v259
  %261 = vdwg.mxu0
  %262 = vst [vmem:[%s13] sm:$0xff] %v258
  %263 = vst [vmem:[%s13 + $0x8] sm:$0xff] %v260
  // Predicated region
  $region54: #{_forward_jit.1} parent=0 // pred_check
    _
  $region55: #{_forward_jit.1} parent=0 // pred_check_branch
    %265 = sbr.rel (0) target = $region57
  $region56: #{_forward_jit.1} parent=0 // pred_region
    _
  $region57: #{_forward_jit.1} parent=0 // pred_fallthru
    _
  // Predicated region
  $region58: #{_forward_jit.1} parent=0 // pred_check
    _
  $region59: #{_forward_jit.1} parent=0 // pred_check_branch
    %267 = sbr.rel (0) target = $region61
  $region60: #{_forward_jit.1} parent=0 // pred_region
    _
  $region61: #{_forward_jit.1} parent=0 // pred_fallthru
    _

</llo_original>
